<compile_context>
chip_gen: v7x
topology: tpu7x:2x2x1
jax: 0.10.0
libtpu: 0.0.40
codegen_flags: <defaults>
</compile_context>

<pallas_src>
import functools

import numpy as np
import jax
import jax.numpy as jnp
from jax import lax
from jax.experimental import pallas as pl
from jax.experimental.pallas import tpu as pltpu


# ----------------------------------------------------------------------------
# pltpu.roll rotate-direction probe (tiny on-device kernel, cached).  Probing
# on the same execution path as the real kernel keeps the static shift amounts
# robust to either rotate-direction convention.
# ----------------------------------------------------------------------------
@functools.lru_cache(maxsize=None)
def _roll_matches_numpy():
    """True iff pltpu.roll(x, 1, ax)[i] == x[(i - 1) % n] (np.roll convention)."""
    def probe(x_ref, o_ref):
        o_ref[...] = pltpu.roll(x_ref[...], 1, 1)

    x = jnp.tile(jnp.arange(128, dtype=jnp.float32)[None, :], (8, 1))
    y = pl.pallas_call(
        probe, out_shape=jax.ShapeDtypeStruct((8, 128), jnp.float32))(x)
    return bool(np.asarray(y)[0, 0] > 64.0)


def make_roll_shifts(row, col):
    # (fwd_r, fwd_c, bwd_r, bwd_c): static rotate amounts such that
    #   roll(x, fwd_c, axis=1)[:, j] == x[:, (j + 1) % col]  (ForwardDiff)
    #   roll(x, bwd_c, axis=1)[:, j] == x[:, (j - 1) % col]  (Dive / adjoint)
    if _roll_matches_numpy():
        return (row - 1, col - 1, 1, 1)
    return (1, 1, row - 1, col - 1)


# ----------------------------------------------------------------------------
# Pallas kernel: full ADMM iteration loop (no grid; lam streamed by hand).
# ----------------------------------------------------------------------------
def admm_kernel(shifts, rho_ref, y_ref, lam_hbm, eig_ref,
                frhR_ref, frhI_ref, fcR_ref, fcI_ref, gR_ref, gI_ref,
                x_ref, v1_ref, v2_ref, y1_ref, y2_ref, lam_buf, lam_sem):
    fwd_r, fwd_c, bwd_r, bwd_c = shifts
    K = lam_hbm.shape[0]
    f32 = jnp.float32

    def lam_copy(k_idx, slot):
        # slot is allowed to be a traced scalar; k_idx is traced on .start().
        return pltpu.make_async_copy(lam_hbm.at[k_idx], lam_buf.at[slot],
                                     lam_sem.at[slot])

    # Prime the first lam tile while we zero-init the ADMM state.
    lam_copy(0, 0).start()

    zero = jnp.zeros(y_ref.shape, f32)
    v1_ref[...] = zero
    v2_ref[...] = zero
    y1_ref[...] = zero
    y2_ref[...] = zero

    def mm(a, b):
        # Pin full-f32 MXU precision (DFT-as-matmul accuracy, per review).
        return jnp.dot(a, b, preferred_element_type=f32,
                       precision=lax.Precision.HIGHEST)

    @pl.loop(0, K)
    def _(k):
        slot = k & 1
        rho_k = rho_ref[k]                       # scalar from SMEM
        inv_rho = 1.0 / rho_k

        # Wait for lam[k]; immediately prefetch lam[k+1] into the other slot.
        lam_copy(0, slot).wait()

        @pl.when(k + 1 < K)
        def _():
            lam_copy(k + 1, 1 - slot).start()

        y = y_ref[...]
        v1 = v1_ref[...]
        v2 = v2_ref[...]
        y1 = y1_ref[...]
        y2 = y2_ref[...]

        # Dive(y1/rho + v1, y2/rho + v2): adjoint of forward diffs via XLU rolls.
        a = y1 * inv_rho + v1
        b = y2 * inv_rho + v2
        div = (pltpu.roll(a, bwd_c, 1) - a) + (pltpu.roll(b, bwd_r, 0) - b)
        rhs = y - rho_k * div

        # --- (I + rho * DtD)^-1 rhs via 2-D DFT with rfft symmetry ----------
        # Only the first Hp (>= H//2+1, sublane padded) frequency rows are
        # computed; the inverse row transform GR/GI folds in the conjugate
        # reflection weights and the 1/(H*W) ifft normalization (exact).
        AR = mm(frhR_ref[...], rhs)                       # (Hp, W)
        AI = mm(frhI_ref[...], rhs)
        FcR = fcR_ref[...]
        FcI = fcI_ref[...]
        BR = mm(AR, FcR) - mm(AI, FcI)
        BI = mm(AR, FcI) + mm(AI, FcR)
        inv_lhs = pl.reciprocal(1.0 + rho_k * eig_ref[...], approx=True)  # EUP
        CR = BR * inv_lhs
        CI = BI * inv_lhs
        DR = mm(CR, FcR) + mm(CI, FcI)
        DI = mm(CI, FcR) - mm(CR, FcI)
        x = mm(gR_ref[...], DR) + mm(gI_ref[...], DI)     # real(ifftn), (H, W)

        # ForwardDiff(x) (periodic) via XLU rolls.
        Dx1 = pltpu.roll(x, fwd_c, 1) - x
        Dx2 = pltpu.roll(x, fwd_r, 0) - x

        u1 = Dx1 + y1 * inv_rho
        u2 = Dx2 + y2 * inv_rho
        thr = lam_buf[slot] * inv_rho

        # shrink(u, thr, 0) == u - clip(u, -thr, thr)   (thr >= 0)
        v1n = u1 - jnp.clip(u1, -thr, thr)
        v2n = u2 - jnp.clip(u2, -thr, thr)

        v1_ref[...] = v1n
        v2_ref[...] = v2n
        y1_ref[...] = y1 - rho_k * (v1n - Dx1)
        y2_ref[...] = y2 - rho_k * (v2n - Dx2)
        x_ref[...] = x


# ----------------------------------------------------------------------------
# Plain-JAX glue: HyPaNet, hoisted DFT/eig constants, wrapper.
# ----------------------------------------------------------------------------
def init_hypanet_params(key, inc, ouc, cha):
    k1, k2 = jax.random.split(key, 2)
    w1 = jax.random.normal(k1, (cha, inc), jnp.float32) * 0.5
    b1 = jnp.full((cha,), 0.1, jnp.float32)
    w2 = jax.random.normal(k2, (ouc, cha), jnp.float32) * 0.5
    b2 = jnp.full((ouc,), 0.1, jnp.float32)
    return (w1, b1, w2, b2)


def hypanet(params, s_val):
    # HyPaNet 1x1-conv MLP on a [1, inc, 1, 1] tensor == tiny dense MLP (glue).
    w1, b1, w2, b2 = params
    x = jnp.full((w1.shape[1],), s_val, jnp.float32)
    h = jax.nn.relu(w1 @ x + b1)
    return jax.nn.softplus(w2 @ h + b2) + 1e-6   # (ouc,) == rho[0, :, 0, 0]


def dft_matrices(n):
    idx = jnp.arange(n)
    phase = (jnp.outer(idx, idx) % n).astype(jnp.float32)
    ang = (-2.0 * jnp.pi / n) * phase
    return jnp.cos(ang).astype(jnp.float32), jnp.sin(ang).astype(jnp.float32)


def _round_up(n, m):
    return ((n + m - 1) // m) * m


def make_admm_constants(row, col):
    """Hoisted constants (half-row DFT + symmetry-folded inverse + eigDtD)."""
    FrR, FrI = dft_matrices(row)                 # (H, H), Fr = FrR + i*FrI
    FcR, FcI = dft_matrices(col)                 # (W, W)
    Hh = row // 2 + 1                            # rfft rows actually needed
    Hp = min(_round_up(Hh, 8), row)              # sublane-aligned padding

    FrhR = FrR[:Hp, :]                           # forward half row transform
    FrhI = FrI[:Hp, :]

    # Inverse (real-output) row transform with conjugate-reflection weights
    # and the 1/(H*W) ifft normalization folded in.  Padded columns are zero.
    w = np.zeros((Hp,), np.float32)
    w[:Hh] = 2.0
    w[0] = 1.0
    if row % 2 == 0:
        w[row // 2] = 1.0
    scale = jnp.asarray(w / float(row * col), jnp.float32)
    GR = (FrR[:, :Hp] * scale[None, :]).astype(jnp.float32)   # (H, Hp)
    GI = (FrI[:, :Hp] * scale[None, :]).astype(jnp.float32)

    # eigDtD = |FFT([1,-1,0..])|^2 (rows) + |FFT([1,-1,0..])|^2 (cols), analytic.
    rr = 2.0 - 2.0 * jnp.cos(2.0 * jnp.pi * jnp.arange(row) / row)
    cc = 2.0 - 2.0 * jnp.cos(2.0 * jnp.pi * jnp.arange(col) / col)
    eig = (rr[:, None] + cc[None, :]).astype(jnp.float32)
    return dict(FrhR=FrhR, FrhI=FrhI, FcR=FcR, FcI=FcI, GR=GR, GI=GI,
                eig_h=eig[:Hp, :], eig=eig)


@functools.lru_cache(maxsize=None)
def _vmem_budget_bytes():
    # Generation-aware cap (v7x: 64 MiB, v5e/v6e: 128 MiB), with fallback.
    try:
        cap = pltpu.get_tpu_info().vmem_capacity_bytes
    except Exception:
        cap = 64 * 1024 * 1024
    return int(cap * 7 // 8)


@functools.partial(jax.jit, static_argnames=("shifts",))
def admm_forward(yo, lam, hyp_params, consts, shifts):
    row, col = yo.shape[1], yo.shape[2]
    K = lam.shape[0]
    Hp = consts["eig_h"].shape[0]
    y = yo[0].astype(jnp.float32)
    rho = hypanet(hyp_params, 2.0)            # (K,), positive scalars

    vmem = pl.BlockSpec(memory_space=pltpu.MemorySpace.VMEM)
    smem = pl.BlockSpec(memory_space=pltpu.MemorySpace.SMEM)
    hbm = pl.BlockSpec(memory_space=pl.ANY)   # lam stays in HBM, streamed

    f32b = 4
    const_bytes = f32b * (2 * Hp * row + 2 * row * Hp + 2 * col * col
                          + Hp * col + row * col)           # Frh, G, Fc, eig, y
    scratch_bytes = f32b * (4 * row * col + 2 * row * col)  # carries + lam slots
    live_bytes = f32b * (10 * Hp * col + 6 * row * col)     # A..D + temps (est.)
    need = const_bytes + scratch_bytes + live_bytes + f32b * row * col
    vmem_limit = int(min(max(2 * need, 32 * 1024 * 1024), _vmem_budget_bytes()))

    mm_macs = 4 * Hp * row * col + 8 * Hp * col * col
    cost = pl.CostEstimate(
        flops=K * (2 * mm_macs + 30 * row * col),
        transcendentals=K * Hp * col,
        bytes_accessed=const_bytes + f32b * (K * row * col + 2 * row * col + K),
    )

    x = pl.pallas_call(
        functools.partial(admm_kernel, shifts),
        out_shape=jax.ShapeDtypeStruct((row, col), jnp.float32),
        in_specs=[smem, vmem, hbm, vmem, vmem, vmem, vmem, vmem, vmem, vmem],
        out_specs=vmem,
        scratch_shapes=[pltpu.VMEM((row, col), jnp.float32),   # v1
                        pltpu.VMEM((row, col), jnp.float32),   # v2
                        pltpu.VMEM((row, col), jnp.float32),   # y1
                        pltpu.VMEM((row, col), jnp.float32),   # y2
                        pltpu.VMEM((2, row, col), jnp.float32),  # lam dbl-buf
                        pltpu.SemaphoreType.DMA((2,))],
        compiler_params=pltpu.CompilerParams(vmem_limit_bytes=vmem_limit),
        cost_estimate=cost,
    )(rho, y, lam.astype(jnp.float32), consts["eig_h"], consts["FrhR"],
      consts["FrhI"], consts["FcR"], consts["FcI"], consts["GR"], consts["GI"])
    return x, rho


# ----------------------------------------------------------------------------
# Pure-JAX reference (mirrors the torch code) for a sanity check.
# ----------------------------------------------------------------------------
def admm_reference(y, lam, rho_vec, eig):
    x = y
    z = jnp.zeros_like(y)
    v1, v2, y1, y2 = z, z, z, z
    for k in range(lam.shape[0]):
        rho = rho_vec[k]
        a = y1 / rho + v1
        b = y2 / rho + v2
        x_diff = jnp.concatenate([a[:, -1:] - a[:, :1], a[:, :-1] - a[:, 1:]], 1)
        y_diff = jnp.concatenate([b[-1:, :] - b[:1, :], b[:-1, :] - b[1:, :]], 0)
        rhs = y - rho * (y_diff + x_diff)
        lhs = 1.0 + rho * eig
        x = jnp.real(jnp.fft.ifftn(jnp.fft.fftn(rhs) / lhs))
        Dx1 = jnp.concatenate([x[:, 1:] - x[:, :-1], x[:, :1] - x[:, -1:]], 1)
        Dx2 = jnp.concatenate([x[1:, :] - x[:-1, :], x[:1, :] - x[-1:, :]], 0)
        u1 = Dx1 + y1 / rho
        u2 = Dx2 + y2 / rho
        thr = lam[k] / rho
        v1 = jnp.sign(u1) * jnp.maximum(jnp.abs(u1) - thr, 0.0)
        v2 = jnp.sign(u2) * jnp.maximum(jnp.abs(u2) - thr, 0.0)
        y1 = y1 - rho * (v1 - Dx1)
        y2 = y2 - rho * (v2 - Dx2)
    return x


if __name__ == "__main__":
    # Small validation size, but lane/sublane aligned (H % 8, W % 128).
    # NOTE: this size is for correctness only — do not benchmark here.
    B, H, W = 2, 16, 128
    INC, K, CHA = 1, 3, 8   # ADMM(inc=1, k=3, cha=8)

    key = jax.random.PRNGKey(0)
    k_yo, k_lam, k_p = jax.random.split(key, 3)
    yo = jax.random.uniform(k_yo, (B, H, W), jnp.float32)
    lam = jax.random.uniform(k_lam, (K, H, W), jnp.float32) * 0.1
    params = init_hypanet_params(k_p, INC, K, CHA)

    consts = make_admm_constants(H, W)
    shifts = make_roll_shifts(H, W)

    x, rho = admm_forward(yo, lam, params, consts, shifts)
    x = jax.block_until_ready(x)

    # Tolerance covers f32 DFT-as-matmul drift + approximate (EUP) reciprocal.
    x_ref = admm_reference(yo[0], lam, rho, consts["eig"])
    err = float(np.max(np.abs(np.asarray(x) - np.asarray(x_ref))))
    assert np.allclose(np.asarray(x), np.asarray(x_ref), rtol=5e-3, atol=5e-3), (
        "max abs diff = %g" % err)

    print("KERNEL_OK")
</pallas_src>

<mosaic_0001>
module attributes {stable_mosaic.version = 11 : i64} {
  func.func @probe(%arg0: memref<8x128xf32, #tpu.memory_space<vmem>>, %arg1: memref<8x128xf32, #tpu.memory_space<vmem>>) attributes {dimension_semantics = [], scalar_prefetch = 0 : i64, scratch_operands = 0 : i64, tpu.core_type = #tpu.core_type<tc>} {
    %c0 = arith.constant 0 : index
    %c0_0 = arith.constant 0 : index
    %0 = vector.load %arg0[%c0, %c0_0] : memref<8x128xf32, #tpu.memory_space<vmem>>, vector<8x128xf32>
    %c1_i32 = arith.constant 1 : i32
    %1 = tpu.dynamic_rotate %0 by %c1_i32 dim 1 : vector<8x128xf32>, i32 -> vector<8x128xf32>
    %c0_1 = arith.constant 0 : index
    %c0_2 = arith.constant 0 : index
    %2 = vector.load %arg1[%c0_1, %c0_2] : memref<8x128xf32, #tpu.memory_space<vmem>>, vector<8x128xf32>
    tpu.vector_store %arg1[%c0_1, %c0_2], %1 {strides = array<i32>} : memref<8x128xf32, #tpu.memory_space<vmem>>, vector<8x128xf32>,
    return
  }
}

</mosaic_0001>

<llo_original>
// kernel: tpu_custom_call.1
$region0: #{tpu_custom_call.1}
  #allocation0 [shape = 'u32[]', space=smem, size = 0x4, offset = 0x4, fixed_abs, tag = 'smem constant byte address 0x4 - core index']
  #allocation1 [shape = 'u32[144,128]{1,0:T(1,128)}', space=vmem, size = 0x12000, scoped, tag = 'internal scratch']
  %s0 = inlined_call_operand.hbm [shape: f32[8,128], index: 0, kind: input, shape index: {}]
  %s1 = inlined_call_operand.hbm [shape: f32[8,128], index: 1, kind: output, shape index: {}]
  %s2 = sld [smem:[#allocation0]]
  $region18: #{tpu_custom_call.1} parent=0
    _
  %s4 = ssub.s32 1, %s2
  %s5 = scalar_select 0, %s4, %s2
  $region1: #{tpu_custom_call.1} parent=0
    #allocation2 [shape = 'u8[4096]{0}', space=vmem, size = 0x1000, scoped, tag = 'input window, operand 0, single buffered']
    #allocation3 [shape = 's32[1]{0}', space=sflag, size = 0x4, scoped, tag = 'scoped memory for tpu_custom_call.1']
    #allocation4 [shape = 's32[1]{0}', space=sflag, size = 0x4, scoped, tag = 'scoped memory for tpu_custom_call.1']
    #allocation5 [shape = 'u8[4096]{0}', space=vmem, size = 0x1000, scoped, tag = 'output window, operand 0, single buffered']
    %6 = vsyncpa [#allocation3], 0
    %7 = vsyncpa [#allocation4], 0
    // Predicated region
    $region2: #{tpu_custom_call.1} parent=1 // pred_check
      _
    $region3: #{tpu_custom_call.1} parent=1 // pred_check_branch
      %9 = sbr.rel (0) target = $region5
    $region4: #{tpu_custom_call.1} parent=1 // pred_region
      %s11 = ssub.s32 128, 128
      %12 = vsyncadd [#allocation3], %s11
      %s14 = sshll.u32 [#allocation2], 4
      %s15 = int_to_ptr.vmem [resolvable:$true] %s14
      %17 = dma.hbm_to_vmem [thread:$0]  %s0, 128, %s15, [#allocation3]
    $region5: #{tpu_custom_call.1} parent=1 // pred_fallthru
      _
    // Predicated region
    $region6: #{tpu_custom_call.1} parent=1 // pred_check
      _
    $region7: #{tpu_custom_call.1} parent=1 // pred_check_branch
      %19 = sbr.rel (0) target = $region9
    $region8: #{tpu_custom_call.1} parent=1 // pred_region
      %20 = dma.done [#allocation3], 128
    $region9: #{tpu_custom_call.1} parent=1 // pred_fallthru
      _
    %v21 = vld [vmem:[#allocation2] sm:$0xff]
    %22 = vrot.lane.b32.xlu0 %v21, 1
    %v23 = vpop.permute.xlu0 %22
    %24 = vst [vmem:[#allocation5] sm:$0xff] %v23
    // Predicated region
    $region10: #{tpu_custom_call.1} parent=1 // pred_check
      _
    $region11: #{tpu_custom_call.1} parent=1 // pred_check_branch
      %26 = sbr.rel (0) target = $region13
    $region12: #{tpu_custom_call.1} parent=1 // pred_region
      %s28 = ssub.s32 128, 128
      %29 = vsyncadd [#allocation4], %s28
      %s31 = sshll.u32 [#allocation5], 4
      %s32 = int_to_ptr.vmem [resolvable:$true] %s31
      %34 = dma.vmem_to_hbm [thread:$0]  %s32, 128, %s1, [#allocation4]
    $region13: #{tpu_custom_call.1} parent=1 // pred_fallthru
      _
    // Predicated region
    $region14: #{tpu_custom_call.1} parent=1 // pred_check
      _
    $region15: #{tpu_custom_call.1} parent=1 // pred_check_branch
      %36 = sbr.rel (0) target = $region17
    $region16: #{tpu_custom_call.1} parent=1 // pred_region
      %37 = dma.done [#allocation4], 128
    $region17: #{tpu_custom_call.1} parent=1 // pred_fallthru
      _
    %38 = vsyncpa [#allocation3], 1
    %39 = vsyncpa [#allocation4], 1

</llo_original>
